<compile_context>
chip_gen: v5e
topology: v5e:2x2
jax: 0.10.0
libtpu: 0.0.40
codegen_flags: <defaults>
</compile_context>

<pallas_src>
import functools
import math

import jax
import jax.numpy as jnp
from jax.experimental import pallas as pl
from jax.experimental.pallas import tpu as pltpu


def _round_up(x, m):
    return ((x + m - 1) // m) * m


def _apply_activation(x, name):
    if name == "gelu":
        # TODO(synk): PyTorch F.gelu defaults to the exact erf-based gelu; the
        # tanh approximation is used here for robust Mosaic lowering
        # (deviation ~1e-3).
        c = 0.7978845608028654  # sqrt(2/pi)
        return 0.5 * x * (1.0 + jnp.tanh(c * (x + 0.044715 * x * x * x)))
    if name == "relu":
        return jnp.maximum(x, 0.0)
    if name == "tanh":
        return jnp.tanh(x)
    if name == "linear":
        return x
    raise ValueError(f"activation {name!r} not supported")


def _nonlinear_head_kernel(x_ref, w1_ref, b1_ref, w2_ref, b2_ref, o_ref,
                           *, activation, compute_dtype):
    x = x_ref[...]                                          # (TM, IN) caller dtype
    lhs1 = x if x.dtype == compute_dtype else x.astype(compute_dtype)
    h = jnp.dot(lhs1, w1_ref[...], preferred_element_type=jnp.float32)
    h = h + b1_ref[...]                                     # (TM, HID) f32
    h = _apply_activation(h, activation)                    # elementwise in f32
    lhs2 = h if h.dtype == compute_dtype else h.astype(compute_dtype)
    y = jnp.dot(lhs2, w2_ref[...], preferred_element_type=jnp.float32)
    y = y + b2_ref[...]                                     # (TM, OUT_PAD) f32
    o_ref[...] = y.astype(o_ref.dtype)


def _pick_tile_m(M, requested):
    """Row-tile choice: big tiles, but a deep & even grid once M is large."""
    if requested is not None:
        return max(8, min(int(requested), _round_up(M, 8)))
    if M <= 512:
        return _round_up(M, 8)            # one/few steps; nothing to pipeline
    tile = 1024
    steps_wanted = 8 if M >= 2048 else 4  # >= 4 steps per v7x TensorCore
    tile = min(tile, max(256, _round_up(pl.cdiv(M, steps_wanted), 256)))
    grid = pl.cdiv(M, tile)
    if grid > 1 and grid % 2:             # even step count -> both TCs busy
        alt = _round_up(pl.cdiv(M, grid + 1), 8)
        if alt >= 128:
            tile = alt
    return tile


def nonlinear_head(x, params, *, activation="gelu", tile_m=None,
                   bf16_matmul=True, out_dtype=None):
    """NonLinearHead.forward: x [..., input_dim] -> [..., out_dim]."""
    *lead, in_dim = x.shape
    M = int(math.prod(lead)) if lead else 1
    w1, b1, w2, b2 = params["w1"], params["b1"], params["w2"], params["b2"]
    hidden = w1.shape[1]
    out_dim = w2.shape[1]
    assert w1.shape == (in_dim, hidden)
    assert w2.shape == (hidden, out_dim)

    compute_dtype = jnp.bfloat16 if bf16_matmul else jnp.float32
    if out_dtype is None:
        out_dtype = x.dtype               # match caller I/O dtype by default

    # Weights: ideally already stored in compute_dtype (init_params does this);
    # cast only if the caller handed f32 weights with bf16_matmul=True.
    if w1.dtype != compute_dtype:
        w1 = w1.astype(compute_dtype)
    if w2.dtype != compute_dtype:
        w2 = w2.astype(compute_dtype)
    b1 = b1.reshape(1, hidden).astype(jnp.float32)
    b2 = b2.reshape(1, out_dim).astype(jnp.float32)

    # Lane-density guard: keep the output last dim >= 128 so stores are
    # unmasked, full-lane vst; slice the padding off in the wrapper.
    out_pad = out_dim if out_dim >= 128 else 128
    if out_pad != out_dim:
        w2 = jnp.pad(w2, ((0, 0), (0, out_pad - out_dim)))
        b2 = jnp.pad(b2, ((0, 0), (0, out_pad - out_dim)))

    tile = _pick_tile_m(M, tile_m)
    grid_m = pl.cdiv(M, tile)

    x2 = x.reshape(M, in_dim)             # no dtype change: keep caller dtype

    # Constant-index-map (VMEM-resident) operands: single-buffer them only
    # when large enough to matter (v7x: 64 MiB VMEM, 32 MiB scoped default).
    w_bytes = (in_dim * hidden + hidden * out_pad) * jnp.dtype(compute_dtype).itemsize
    w_mode = pl.Buffered(1) if w_bytes > (8 << 20) else None

    kernel = functools.partial(_nonlinear_head_kernel,
                               activation=activation,
                               compute_dtype=compute_dtype)

    flops = 2 * M * (in_dim * hidden + hidden * out_dim)
    transcendentals = M * hidden if activation in ("gelu", "tanh") else 0
    bytes_accessed = (
        x2.size * x2.dtype.itemsize
        + w1.size * w1.dtype.itemsize + w2.size * w2.dtype.itemsize
        + b1.size * 4 + b2.size * 4
        + M * out_pad * jnp.dtype(out_dtype).itemsize)

    out = pl.pallas_call(
        kernel,
        out_shape=jax.ShapeDtypeStruct((M, out_pad), out_dtype),
        grid_spec=pl.GridSpec(
            grid=(grid_m,),
            in_specs=[
                pl.BlockSpec((tile, in_dim), lambda i: (i, 0)),       # x rows
                pl.BlockSpec((in_dim, hidden), lambda i: (0, 0),
                             pipeline_mode=w_mode),                   # W1 resident
                pl.BlockSpec((1, hidden), lambda i: (0, 0)),          # b1
                pl.BlockSpec((hidden, out_pad), lambda i: (0, 0),
                             pipeline_mode=w_mode),                   # W2 resident
                pl.BlockSpec((1, out_pad), lambda i: (0, 0)),         # b2
            ],
            out_specs=pl.BlockSpec((tile, out_pad), lambda i: (i, 0)),
        ),
        compiler_params=pltpu.CompilerParams(
            dimension_semantics=("parallel",)),
        cost_estimate=pl.CostEstimate(flops=flops,
                                      transcendentals=transcendentals,
                                      bytes_accessed=bytes_accessed),
    )(x2, w1, b1, w2, b2)

    if out_pad != out_dim:
        out = out[:, :out_dim]
    return out.reshape(*lead, out_dim)


def nonlinear_head_ref(x, params, *, activation="gelu", bf16_matmul=True,
                       out_dtype=None):
    """Pure-JAX reference mirroring the kernel numerics."""
    if out_dtype is None:
        out_dtype = x.dtype
    cd = jnp.bfloat16 if bf16_matmul else jnp.float32
    w1 = params["w1"].astype(cd)
    w2 = params["w2"].astype(cd)
    h = jnp.dot(x.astype(cd), w1, preferred_element_type=jnp.float32)
    h = h + params["b1"].astype(jnp.float32)
    h = _apply_activation(h, activation)
    y = jnp.dot(h.astype(cd), w2, preferred_element_type=jnp.float32)
    y = y + params["b2"].astype(jnp.float32)
    return y.astype(out_dtype)


def init_params(key, input_dim, out_dim, hidden=None, *, weight_dtype=jnp.bfloat16):
    """nn.Linear default init; weights stored pre-transposed (y = x @ w + b) and
    pre-cast to the MXU compute dtype (bf16) so no per-call cast is needed."""
    hidden = input_dim if not hidden else hidden
    k1, k2, k3, k4 = jax.random.split(key, 4)
    bnd1 = 1.0 / math.sqrt(input_dim)
    bnd2 = 1.0 / math.sqrt(hidden)
    return {
        "w1": jax.random.uniform(k1, (input_dim, hidden), jnp.float32,
                                 -bnd1, bnd1).astype(weight_dtype),
        "b1": jax.random.uniform(k2, (hidden,), jnp.float32, -bnd1, bnd1),
        "w2": jax.random.uniform(k3, (hidden, out_dim), jnp.float32,
                                 -bnd2, bnd2).astype(weight_dtype),
        "b2": jax.random.uniform(k4, (out_dim,), jnp.float32, -bnd2, bnd2),
    }


if __name__ == "__main__":
    key = jax.random.PRNGKey(0)
    kx1, kx2, kp1, kp2 = jax.random.split(key, 4)

    # Case 1: NonLinearHead(input_dim=128, out_dim=128, "gelu", hidden=256),
    # bf16 input, bf16 output (default out_dtype = input dtype).
    B, S, IN, HID, OUT = 2, 16, 128, 256, 128
    params = init_params(kp1, IN, OUT, hidden=HID)
    x1 = jax.random.normal(kx1, (B, S, IN), jnp.float32).astype(jnp.bfloat16)
    y1 = jax.block_until_ready(nonlinear_head(x1, params, activation="gelu"))
    assert y1.shape == (B, S, OUT) and y1.dtype == jnp.bfloat16
    r1 = nonlinear_head_ref(x1, params, activation="gelu")
    d1 = jnp.max(jnp.abs(y1.astype(jnp.float32) - r1.astype(jnp.float32)))
    assert float(d1) < 5e-2, float(d1)

    # Case 2: ragged rows (M=18) + small out_dim (64 < 128) exercising the
    # OOB-masked partial row block and the lane-dense output padding path;
    # f32 input -> cast to bf16 inside the kernel, f32 output requested.
    OUT2 = 64
    params2 = init_params(kp2, IN, OUT2, hidden=HID)
    x2 = jax.random.normal(kx2, (2, 9, IN), jnp.float32)
    y2 = jax.block_until_ready(
        nonlinear_head(x2, params2, activation="gelu", out_dtype=jnp.float32))
    assert y2.shape == (2, 9, OUT2) and y2.dtype == jnp.float32
    r2 = nonlinear_head_ref(x2, params2, activation="gelu",
                            out_dtype=jnp.float32)
    d2 = jnp.max(jnp.abs(y2 - r2))
    assert float(d2) < 5e-2, float(d2)

    print("KERNEL_OK")
</pallas_src>

<mosaic_0001>
module attributes {stable_mosaic.version = 11 : i64} {
  func.func @_nonlinear_head_kernel(%arg0: i32, %arg1: memref<32x128xbf16, #tpu.memory_space<vmem>>, %arg2: memref<128x256xbf16, #tpu.memory_space<vmem>>, %arg3: memref<1x256xf32, #tpu.memory_space<vmem>>, %arg4: memref<256x128xbf16, #tpu.memory_space<vmem>>, %arg5: memref<1x128xf32, #tpu.memory_space<vmem>>, %arg6: memref<32x128xbf16, #tpu.memory_space<vmem>>) attributes {dimension_semantics = [#tpu.dimension_semantics<parallel>], iteration_bounds = array<i64: 1>, scalar_prefetch = 0 : i64, scratch_operands = 0 : i64, tpu.core_type = #tpu.core_type<tc>, window_params = [{transform_indices = @transform_0, window_bounds = array<i64: 32, 128>}, {pipeline_mode = #tpu.pipeline_mode<synchronous>, transform_indices = @transform_1, window_bounds = array<i64: 128, 256>}, {pipeline_mode = #tpu.pipeline_mode<synchronous>, transform_indices = @transform_2, window_bounds = array<i64: 1, 256>}, {pipeline_mode = #tpu.pipeline_mode<synchronous>, transform_indices = @transform_3, window_bounds = array<i64: 256, 128>}, {pipeline_mode = #tpu.pipeline_mode<synchronous>, transform_indices = @transform_4, window_bounds = array<i64: 1, 128>}, {transform_indices = @transform_5, window_bounds = array<i64: 32, 128>}]} {
    %c0 = arith.constant 0 : index
    %c0_0 = arith.constant 0 : index
    %0 = vector.load %arg1[%c0, %c0_0] : memref<32x128xbf16, #tpu.memory_space<vmem>>, vector<32x128xbf16>
    %c0_1 = arith.constant 0 : index
    %c0_2 = arith.constant 0 : index
    %1 = vector.load %arg2[%c0_1, %c0_2] : memref<128x256xbf16, #tpu.memory_space<vmem>>, vector<128x256xbf16>
    %cst = arith.constant dense<0.000000e+00> : vector<32x256xf32>
    %2 = tpu.matmul %0, %1, %cst {dimension_numbers = #tpu.dot_dimension_numbers<[1], [0], [0], [1], [0, 0, 1, 1], [], []>} : vector<32x128xbf16>, vector<128x256xbf16>, vector<32x256xf32> -> vector<32x256xf32>
    %c0_3 = arith.constant 0 : index
    %c0_4 = arith.constant 0 : index
    %3 = vector.load %arg3[%c0_3, %c0_4] : memref<1x256xf32, #tpu.memory_space<vmem>>, vector<1x256xf32>
    %4 = vector.broadcast %3 : vector<1x256xf32> to vector<32x256xf32>
    %5 = arith.addf %2, %4 : vector<32x256xf32>
    %cst_5 = arith.constant 5.000000e-01 : f32
    %6 = vector.broadcast %cst_5 : f32 to vector<32x256xf32>
    %7 = arith.mulf %6, %5 : vector<32x256xf32>
    %cst_6 = arith.constant 4.471500e-02 : f32
    %8 = vector.broadcast %cst_6 : f32 to vector<32x256xf32>
    %9 = arith.mulf %8, %5 : vector<32x256xf32>
    %10 = arith.mulf %9, %5 : vector<32x256xf32>
    %11 = arith.mulf %10, %5 : vector<32x256xf32>
    %12 = arith.addf %5, %11 : vector<32x256xf32>
    %cst_7 = arith.constant 0.797884583 : f32
    %13 = vector.broadcast %cst_7 : f32 to vector<32x256xf32>
    %14 = arith.mulf %13, %12 : vector<32x256xf32>
    %15 = math.tanh %14 : vector<32x256xf32>
    %cst_8 = arith.constant 1.000000e+00 : f32
    %16 = vector.broadcast %cst_8 : f32 to vector<32x256xf32>
    %17 = arith.addf %16, %15 : vector<32x256xf32>
    %18 = arith.mulf %7, %17 : vector<32x256xf32>
    %19 = arith.truncf %18 : vector<32x256xf32> to vector<32x256xbf16>
    %c0_9 = arith.constant 0 : index
    %c0_10 = arith.constant 0 : index
    %20 = vector.load %arg4[%c0_9, %c0_10] : memref<256x128xbf16, #tpu.memory_space<vmem>>, vector<256x128xbf16>
    %cst_11 = arith.constant dense<0.000000e+00> : vector<32x128xf32>
    %21 = tpu.matmul %19, %20, %cst_11 {dimension_numbers = #tpu.dot_dimension_numbers<[1], [0], [0], [1], [0, 0, 1, 1], [], []>} : vector<32x256xbf16>, vector<256x128xbf16>, vector<32x128xf32> -> vector<32x128xf32>
    %c0_12 = arith.constant 0 : index
    %c0_13 = arith.constant 0 : index
    %22 = vector.load %arg5[%c0_12, %c0_13] : memref<1x128xf32, #tpu.memory_space<vmem>>, vector<1x128xf32>
    %23 = vector.broadcast %22 : vector<1x128xf32> to vector<32x128xf32>
    %24 = arith.addf %21, %23 : vector<32x128xf32>
    %25 = arith.truncf %24 : vector<32x128xf32> to vector<32x128xbf16>
    %c0_14 = arith.constant 0 : index
    %c0_15 = arith.constant 0 : index
    %26 = vector.load %arg6[%c0_14, %c0_15] : memref<32x128xbf16, #tpu.memory_space<vmem>>, vector<32x128xbf16>
    tpu.vector_store %arg6[%c0_14, %c0_15], %25 {strides = array<i32>} : memref<32x128xbf16, #tpu.memory_space<vmem>>, vector<32x128xbf16>,
    return
  }
  func.func @transform_0(%arg0: i32) -> (i32, i32) {
    %c0_i32 = arith.constant 0 : i32
    %c0_i32_0 = arith.constant 0 : i32
    return %arg0, %c0_i32 : i32, i32
  }
  func.func @transform_1(%arg0: i32) -> (i32, i32) {
    %c0_i32 = arith.constant 0 : i32
    %c0_i32_0 = arith.constant 0 : i32
    %c0_i32_1 = arith.constant 0 : i32
    return %c0_i32, %c0_i32_0 : i32, i32
  }
  func.func @transform_2(%arg0: i32) -> (i32, i32) {
    %c0_i32 = arith.constant 0 : i32
    %c0_i32_0 = arith.constant 0 : i32
    %c0_i32_1 = arith.constant 0 : i32
    return %c0_i32, %c0_i32_0 : i32, i32
  }
  func.func @transform_3(%arg0: i32) -> (i32, i32) {
    %c0_i32 = arith.constant 0 : i32
    %c0_i32_0 = arith.constant 0 : i32
    %c0_i32_1 = arith.constant 0 : i32
    return %c0_i32, %c0_i32_0 : i32, i32
  }
  func.func @transform_4(%arg0: i32) -> (i32, i32) {
    %c0_i32 = arith.constant 0 : i32
    %c0_i32_0 = arith.constant 0 : i32
    %c0_i32_1 = arith.constant 0 : i32
    return %c0_i32, %c0_i32_0 : i32, i32
  }
  func.func @transform_5(%arg0: i32) -> (i32, i32) {
    %c0_i32 = arith.constant 0 : i32
    %c0_i32_0 = arith.constant 0 : i32
    return %arg0, %c0_i32 : i32, i32
  }
}

</mosaic_0001>

<llo_original>
// kernel: tpu_custom_call.1
$region0: #{tpu_custom_call.1}
  #allocation0 [shape = 'u32[]', space=smem, size = 0x4, offset = 0x4, fixed_abs, tag = 'smem constant byte address 0x4 - core index']
  #allocation1 [shape = 'u32[72,128]{1,0:T(1,128)}', space=vmem, size = 0x9000, scoped, tag = 'internal scratch']
  %s0 = inlined_call_operand.hbm [shape: bf16[32,128], index: 0, kind: input, shape index: {}]
  %s1 = inlined_call_operand.hbm [shape: bf16[128,256], index: 1, kind: input, shape index: {}]
  %s2 = inlined_call_operand.hbm [shape: f32[1,256], index: 2, kind: input, shape index: {}]
  %s3 = inlined_call_operand.hbm [shape: bf16[256,128], index: 3, kind: input, shape index: {}]
  %s4 = inlined_call_operand.vmem [shape: f32[1,128], index: 4, kind: input, shape index: {}]
  %s5 = inlined_call_operand.hbm [shape: bf16[32,128], index: 5, kind: output, shape index: {}]
  %s6 = sld [smem:[#allocation0]]
  $region46: #{tpu_custom_call.1} parent=0
    _
  %s8 = ssub.s32 1, %s6
  %s9 = scalar_select 0, %s8, %s6
  $region1: #{tpu_custom_call.1} parent=0
    #allocation2 [shape = 'u8[8192]{0}', space=vmem, size = 0x2000, scoped, tag = 'input window, operand 0, single buffered']
    #allocation3 [shape = 's32[1]{0}', space=sflag, size = 0x4, scoped, tag = 'scoped memory for tpu_custom_call.1']
    #allocation4 [shape = 's32[1]{0}', space=sflag, size = 0x4, scoped, tag = 'scoped memory for tpu_custom_call.1']
    #allocation5 [shape = 'u8[65536]{0}', space=vmem, size = 0x10000, scoped, tag = 'input window, operand 1, single buffered']
    #allocation6 [shape = 's32[1]{0}', space=sflag, size = 0x4, scoped, tag = 'scoped memory for tpu_custom_call.1']
    #allocation7 [shape = 'u8[1024]{0}', space=vmem, size = 0x400, scoped, tag = 'input window, operand 2, single buffered']
    #allocation8 [shape = 'u8[65536]{0}', space=vmem, size = 0x10000, scoped, tag = 'input window, operand 3, single buffered']
    #allocation9 [shape = 's32[1]{0}', space=sflag, size = 0x4, scoped, tag = 'scoped memory for tpu_custom_call.1']
    #allocation10 [shape = 'u8[8192]{0}', space=vmem, size = 0x2000, scoped, tag = 'output window, operand 0, single buffered']
    %10 = vsyncpa [#allocation3], 0
    %11 = vsyncpa [#allocation6], 0
    %12 = vsyncpa [#allocation9], 0
    %13 = vsyncpa [#allocation4], 0
    // Predicated region
    $region2: #{tpu_custom_call.1} parent=1 // pred_check
      _
    $region3: #{tpu_custom_call.1} parent=1 // pred_check_branch
      %15 = sbr.rel (0) target = $region5
    $region4: #{tpu_custom_call.1} parent=1 // pred_region
      %17 = vsyncadd [#allocation3], 0
      %s18 = sshll.u32 %s0, 4
      %s19 = int_to_ptr.hbm [resolvable:$true] %s18
      %s20 = sshll.u32 [#allocation2], 4
      %s21 = int_to_ptr.vmem [resolvable:$true] %s20
      %26 = dma.hbm_to_vmem [thread:$0]  %s19, 256, %s21, [#allocation3], 64, 64, 4
    $region5: #{tpu_custom_call.1} parent=1 // pred_fallthru
      _
    // Predicated region
    $region6: #{tpu_custom_call.1} parent=1 // pred_check
      _
    $region7: #{tpu_custom_call.1} parent=1 // pred_check_branch
      %28 = sbr.rel (0) target = $region9
    $region8: #{tpu_custom_call.1} parent=1 // pred_region
      %30 = vsyncadd [#allocation6], 0
      %s31 = sshll.u32 %s1, 4
      %s32 = int_to_ptr.hbm [resolvable:$true] %s31
      %s33 = sshll.u32 [#allocation5], 4
      %s34 = int_to_ptr.vmem [resolvable:$true] %s33
      %39 = dma.hbm_to_vmem [thread:$0]  %s32, 2048, %s34, [#allocation6], 128, 128, 8
    $region9: #{tpu_custom_call.1} parent=1 // pred_fallthru
      _
    // Predicated region
    $region10: #{tpu_custom_call.1} parent=1 // pred_check
      _
    $region11: #{tpu_custom_call.1} parent=1 // pred_check_branch
      %41 = sbr.rel (0) target = $region13
    $region12: #{tpu_custom_call.1} parent=1 // pred_region
      %43 = vsyncadd [#allocation6], 0
      %s45 = sshll.u32 %s2, 4
      %s46 = int_to_ptr.hbm [resolvable:$true] %s45
      %s47 = sshll.u32 [#allocation7], 4
      %s48 = int_to_ptr.vmem [resolvable:$true] %s47
      %50 = dma.hbm_to_vmem [thread:$0]  %s46, 32, %s48, [#allocation6]
    $region13: #{tpu_custom_call.1} parent=1 // pred_fallthru
      _
    // Predicated region
    $region14: #{tpu_custom_call.1} parent=1 // pred_check
      _
    $region15: #{tpu_custom_call.1} parent=1 // pred_check_branch
      %52 = sbr.rel (0) target = $region17
    $region16: #{tpu_custom_call.1} parent=1 // pred_region
      %54 = vsyncadd [#allocation9], 0
      %s55 = sshll.u32 %s3, 4
      %s56 = int_to_ptr.hbm [resolvable:$true] %s55
      %s57 = sshll.u32 [#allocation8], 4
      %s58 = int_to_ptr.vmem [resolvable:$true] %s57
      %63 = dma.hbm_to_vmem [thread:$0]  %s56, 2048, %s58, [#allocation9], 64, 64, 4
    $region17: #{tpu_custom_call.1} parent=1 // pred_fallthru
      _
    // Predicated region
    $region18: #{tpu_custom_call.1} parent=1 // pred_check
      _
    $region19: #{tpu_custom_call.1} parent=1 // pred_check_branch
      %65 = sbr.rel (0) target = $region21
    $region20: #{tpu_custom_call.1} parent=1 // pred_region
      _
    $region21: #{tpu_custom_call.1} parent=1 // pred_fallthru
      _
    // Predicated region
    $region22: #{tpu_custom_call.1} parent=1 // pred_check
      _
    $region23: #{tpu_custom_call.1} parent=1 // pred_check_branch
      %67 = sbr.rel (0) target = $region25
    $region24: #{tpu_custom_call.1} parent=1 // pred_region
      %69 = dma.done [#allocation3], 256
    $region25: #{tpu_custom_call.1} parent=1 // pred_fallthru
      _
    // Predicated region
    $region26: #{tpu_custom_call.1} parent=1 // pred_check
      _
    $region27: #{tpu_custom_call.1} parent=1 // pred_check_branch
      %71 = sbr.rel (0) target = $region29
    $region28: #{tpu_custom_call.1} parent=1 // pred_region
      %73 = dma.done [#allocation6], 2048
    $region29: #{tpu_custom_call.1} parent=1 // pred_fallthru
      _
    // Predicated region
    $region30: #{tpu_custom_call.1} parent=1 // pred_check
      _
    $region31: #{tpu_custom_call.1} parent=1 // pred_check_branch
      %75 = sbr.rel (0) target = $region33
    $region32: #{tpu_custom_call.1} parent=1 // pred_region
      %77 = dma.done [#allocation6], 32
    $region33: #{tpu_custom_call.1} parent=1 // pred_fallthru
      _
    // Predicated region
    $region34: #{tpu_custom_call.1} parent=1 // pred_check
      _
    $region35: #{tpu_custom_call.1} parent=1 // pred_check_branch
      %79 = sbr.rel (0) target = $region37
    $region36: #{tpu_custom_call.1} parent=1 // pred_region
      %81 = dma.done [#allocation9], 2048
    $region37: #{tpu_custom_call.1} parent=1 // pred_fallthru
      _
    %v82 = vld [vmem:[#allocation2] sm:$0xf]
    %v83 = vld [vmem:[#allocation2 + $0x4] sm:$0xf]
    %v84 = vld [vmem:[#allocation2 + $0x8] sm:$0xf]
    %v85 = vld [vmem:[#allocation2 + $0xc] sm:$0xf]
    %v86 = vld [vmem:[#allocation5] sm:$0xff]
    %v87 = vld [vmem:[#allocation5 + $0x8] sm:$0xff]
    %v88 = vld [vmem:[#allocation5 + $0x10] sm:$0xff]
    %v89 = vld [vmem:[#allocation5 + $0x18] sm:$0xff]
    %v90 = vld [vmem:[#allocation5 + $0x20] sm:$0xff]
    %v91 = vld [vmem:[#allocation5 + $0x28] sm:$0xff]
    %v92 = vld [vmem:[#allocation5 + $0x30] sm:$0xff]
    %v93 = vld [vmem:[#allocation5 + $0x38] sm:$0xff]
    %v94 = vld [vmem:[#allocation5 + $0x40] sm:$0xff]
    %v95 = vld [vmem:[#allocation5 + $0x48] sm:$0xff]
    %v96 = vld [vmem:[#allocation5 + $0x50] sm:$0xff]
    %v97 = vld [vmem:[#allocation5 + $0x58] sm:$0xff]
    %v98 = vld [vmem:[#allocation5 + $0x60] sm:$0xff]
    %v99 = vld [vmem:[#allocation5 + $0x68] sm:$0xff]
    %v100 = vld [vmem:[#allocation5 + $0x70] sm:$0xff]
    %v101 = vld [vmem:[#allocation5 + $0x78] sm:$0xff]
    %v102 = vld [vmem:[#allocation7] sm:$0x3]
    %v104 = vperm.slane %v102, 0
    %v105 = vperm.slane %v102, 1
    %v112 = vunpack.c.l.b16 %v82
    %v113 = vunpack.c.l.b16 %v83
    %v114 = vunpack.c.l.b16 %v84
    %v115 = vunpack.c.l.b16 %v85
    %v116 = vpack.c.b16 %v113, %v112
    %v117 = vpack.c.b16 %v115, %v114
    %v136 = vunpack.c.l.b16 %v86
    %v137 = vunpack.c.h.b16 %v86
    %v138 = vunpack.c.l.b16 %v87
    %v139 = vunpack.c.h.b16 %v87
    %v140 = vunpack.c.l.b16 %v88
    %v141 = vunpack.c.h.b16 %v88
    %v142 = vunpack.c.l.b16 %v89
    %v143 = vunpack.c.h.b16 %v89
    %v144 = vunpack.c.l.b16 %v90
    %v145 = vunpack.c.h.b16 %v90
    %v146 = vunpack.c.l.b16 %v91
    %v147 = vunpack.c.h.b16 %v91
    %v148 = vunpack.c.l.b16 %v92
    %v149 = vunpack.c.h.b16 %v92
    %v150 = vunpack.c.l.b16 %v93
    %v151 = vunpack.c.h.b16 %v93
    %v152 = vunpack.c.l.b16 %v94
    %v153 = vunpack.c.h.b16 %v94
    %v154 = vunpack.c.l.b16 %v95
    %v155 = vunpack.c.h.b16 %v95
    %v156 = vunpack.c.l.b16 %v96
    %v157 = vunpack.c.h.b16 %v96
    %v158 = vunpack.c.l.b16 %v97
    %v159 = vunpack.c.h.b16 %v97
    %v160 = vunpack.c.l.b16 %v98
    %v161 = vunpack.c.h.b16 %v98
    %v162 = vunpack.c.l.b16 %v99
    %v163 = vunpack.c.h.b16 %v99
    %v164 = vunpack.c.l.b16 %v100
    %v165 = vunpack.c.h.b16 %v100
    %v166 = vunpack.c.l.b16 %v101
    %v167 = vunpack.c.h.b16 %v101
    %v168 = vpack.c.b16 %v138, %v136
    %v169 = vpack.c.b16 %v139, %v137
    %v170 = vpack.c.b16 %v142, %v140
    %v171 = vpack.c.b16 %v143, %v141
    %v172 = vpack.c.b16 %v146, %v144
    %v173 = vpack.c.b16 %v147, %v145
    %v174 = vpack.c.b16 %v150, %v148
    %v175 = vpack.c.b16 %v151, %v149
    %v176 = vpack.c.b16 %v154, %v152
    %v177 = vpack.c.b16 %v155, %v153
    %v178 = vpack.c.b16 %v158, %v156
    %v179 = vpack.c.b16 %v159, %v157
    %v180 = vpack.c.b16 %v162, %v160
    %v181 = vpack.c.b16 %v163, %v161
    %v182 = vpack.c.b16 %v166, %v164
    %v183 = vpack.c.b16 %v167, %v165
    %200 = vmatpush.bf16.msra.mxu0 %v182
    %201 = vmatpush.bf16.msra.mxu0 %v180
    %202 = vmatpush.bf16.msra.mxu0 %v178
    %203 = vmatpush.bf16.msra.mxu0 %v176
    %204 = vmatpush.bf16.msra.mxu0 %v174
    %205 = vmatpush.bf16.msra.mxu0 %v172
    %206 = vmatpush.bf16.msra.mxu0 %v170
    %207 = vmatpush.bf16.msra.mxu0 %v168
    %208 = vmatmul.bf16.gmra.mxu0 %v116
    %v209 = vpop.f32.mrf.mxu0
    %v210 = vadd.f32 %v104, %v209
    %v211 = vpop.f32.mrf.mxu0
    %v212 = vadd.f32 %v104, %v211
    %213 = vmatmul.bf16.gmra.mxu0 %v117
    %v214 = vpop.f32.mrf.mxu0
    %v215 = vadd.f32 %v104, %v214
    %v216 = vpop.f32.mrf.mxu0
    %v217 = vadd.f32 %v104, %v216
    %218 = vdwg.mxu0
    %219 = vmatpush.bf16.msra.mxu0 %v183
    %220 = vmatpush.bf16.msra.mxu0 %v181
    %221 = vmatpush.bf16.msra.mxu0 %v179
    %222 = vmatpush.bf16.msra.mxu0 %v177
    %223 = vmatpush.bf16.msra.mxu0 %v175
    %224 = vmatpush.bf16.msra.mxu0 %v173
    %225 = vmatpush.bf16.msra.mxu0 %v171
    %226 = vmatpush.bf16.msra.mxu0 %v169
    %227 = vmatmul.bf16.gmra.mxu0 %v116
    %v228 = vpop.f32.mrf.mxu0
    %v229 = vadd.f32 %v105, %v228
    %v230 = vpop.f32.mrf.mxu0
    %v231 = vadd.f32 %v105, %v230
    %232 = vmatmul.bf16.gmra.mxu0 %v117
    %v233 = vpop.f32.mrf.mxu0
    %v234 = vadd.f32 %v105, %v233
    %v235 = vpop.f32.mrf.mxu0
    %v236 = vadd.f32 %v105, %v235
    %237 = vdwg.mxu0
    %v238 = vmul.f32 %v210, 0.5
    %v239 = vmul.f32 %v229, 0.5
    %v240 = vmul.f32 %v212, 0.5
    %v241 = vmul.f32 %v231, 0.5
    %v242 = vmul.f32 %v215, 0.5
    %v243 = vmul.f32 %v234, 0.5
    %v244 = vmul.f32 %v217, 0.5
    %v245 = vmul.f32 %v236, 0.5
    %v246 = vmul.f32 %v210, 0.044715
    %v247 = vmul.f32 %v229, 0.044715
    %v248 = vmul.f32 %v212, 0.044715
    %v249 = vmul.f32 %v231, 0.044715
    %v250 = vmul.f32 %v215, 0.044715
    %v251 = vmul.f32 %v234, 0.044715
    %v252 = vmul.f32 %v217, 0.044715
    %v253 = vmul.f32 %v236, 0.044715
    %v254 = vmul.f32 %v246, %v210
    %v255 = vmul.f32 %v247, %v229
    %v256 = vmul.f32 %v248, %v212
    %v257 = vmul.f32 %v249, %v231
    %v258 = vmul.f32 %v250, %v215
    %v259 = vmul.f32 %v251, %v234
    %v260 = vmul.f32 %v252, %v217
    %v261 = vmul.f32 %v253, %v236
    %v262 = vmul.f32 %v254, %v210
    %v263 = vmul.f32 %v255, %v229
    %v264 = vmul.f32 %v256, %v212
    %v265 = vmul.f32 %v257, %v231
    %v266 = vmul.f32 %v258, %v215
    %v267 = vmul.f32 %v259, %v234
    %v268 = vmul.f32 %v260, %v217
    %v269 = vmul.f32 %v261, %v236
    %v270 = vadd.f32 %v210, %v262
    %v271 = vadd.f32 %v229, %v263
    %v272 = vadd.f32 %v212, %v264
    %v273 = vadd.f32 %v231, %v265
    %v274 = vadd.f32 %v215, %v266
    %v275 = vadd.f32 %v234, %v267
    %v276 = vadd.f32 %v217, %v268
    %v277 = vadd.f32 %v236, %v269
    %v278 = vmul.f32 %v270, 0.7978846
    %v279 = vmul.f32 %v271, 0.7978846
    %v280 = vmul.f32 %v272, 0.7978846
    %v281 = vmul.f32 %v273, 0.7978846
    %v282 = vmul.f32 %v274, 0.7978846
    %v283 = vmul.f32 %v275, 0.7978846
    %v284 = vmul.f32 %v276, 0.7978846
    %v285 = vmul.f32 %v277, 0.7978846
    %v286 = vtanh.pop %v278
    %v287 = vtanh.pop %v279
    %v288 = vtanh.pop %v280
    %v289 = vtanh.pop %v281
    %v290 = vtanh.pop %v282
    %v291 = vtanh.pop %v283
    %v292 = vtanh.pop %v284
    %v293 = vtanh.pop %v285
    %v294 = vadd.f32 %v286, 1.0
    %v295 = vadd.f32 %v287, 1.0
    %v296 = vadd.f32 %v288, 1.0
    %v297 = vadd.f32 %v289, 1.0
    %v298 = vadd.f32 %v290, 1.0
    %v299 = vadd.f32 %v291, 1.0
    %v300 = vadd.f32 %v292, 1.0
    %v301 = vadd.f32 %v293, 1.0
    %v302 = vmul.f32 %v238, %v294
    %v303 = vmul.f32 %v239, %v295
    %v304 = vmul.f32 %v240, %v296
    %v305 = vmul.f32 %v241, %v297
    %v306 = vmul.f32 %v242, %v298
    %v307 = vmul.f32 %v243, %v299
    %v308 = vmul.f32 %v244, %v300
    %v309 = vmul.f32 %v245, %v301
    %v310 = vpack.c.bf16 %v304, %v302
    %v311 = vpack.c.bf16 %v305, %v303
    %v312 = vpack.c.bf16 %v308, %v306
    %v313 = vpack.c.bf16 %v309, %v307
    %v314 = vld [vmem:[#allocation8] sm:$0xf]
    %v315 = vld [vmem:[#allocation8 + $0x4] sm:$0xf]
    %v316 = vld [vmem:[#allocation8 + $0x8] sm:$0xf]
    %v317 = vld [vmem:[#allocation8 + $0xc] sm:$0xf]
    %v318 = vld [vmem:[#allocation8 + $0x10] sm:$0xf]
    %v319 = vld [vmem:[#allocation8 + $0x14] sm:$0xf]
    %v320 = vld [vmem:[#allocation8 + $0x18] sm:$0xf]
    %v321 = vld [vmem:[#allocation8 + $0x1c] sm:$0xf]
    %v322 = vld [vmem:[#allocation8 + $0x20] sm:$0xf]
    %v323 = vld [vmem:[#allocation8 + $0x24] sm:$0xf]
    %v324 = vld [vmem:[#allocation8 + $0x28] sm:$0xf]
    %v325 = vld [vmem:[#allocation8 + $0x2c] sm:$0xf]
    %v326 = vld [vmem:[#allocation8 + $0x30] sm:$0xf]
    %v327 = vld [vmem:[#allocation8 + $0x34] sm:$0xf]
    %v328 = vld [vmem:[#allocation8 + $0x38] sm:$0xf]
    %v329 = vld [vmem:[#allocation8 + $0x3c] sm:$0xf]
    %v330 = vld [vmem:[#allocation8 + $0x40] sm:$0xf]
    %v331 = vld [vmem:[#allocation8 + $0x44] sm:$0xf]
    %v332 = vld [vmem:[#allocation8 + $0x48] sm:$0xf]
    %v333 = vld [vmem:[#allocation8 + $0x4c] sm:$0xf]
    %v334 = vld [vmem:[#allocation8 + $0x50] sm:$0xf]
    %v335 = vld [vmem:[#allocation8 + $0x54] sm:$0xf]
    %v336 = vld [vmem:[#allocation8 + $0x58] sm:$0xf]
    %v337 = vld [vmem:[#allocation8 + $0x5c] sm:$0xf]
    %v338 = vld [vmem:[#allocation8 + $0x60] sm:$0xf]
    %v339 = vld [vmem:[#allocation8 + $0x64] sm:$0xf]
    %v340 = vld [vmem:[#allocation8 + $0x68] sm:$0xf]
    %v341 = vld [vmem:[#allocation8 + $0x6c] sm:$0xf]
    %v342 = vld [vmem:[#allocation8 + $0x70] sm:$0xf]
    %v343 = vld [vmem:[#allocation8 + $0x74] sm:$0xf]
    %v344 = vld [vmem:[#allocation8 + $0x78] sm:$0xf]
    %v345 = vld [vmem:[#allocation8 + $0x7c] sm:$0xf]
    %v346 = vld [vmem:[%s4] sm:$0x1]
    %v348 = vperm.slane %v346, 0
    %v382 = vunpack.c.l.b16 %v314
    %v383 = vunpack.c.l.b16 %v315
    %v384 = vunpack.c.l.b16 %v316
    %v385 = vunpack.c.l.b16 %v317
    %v386 = vunpack.c.l.b16 %v318
    %v387 = vunpack.c.l.b16 %v319
    %v388 = vunpack.c.l.b16 %v320
    %v389 = vunpack.c.l.b16 %v321
    %v390 = vunpack.c.l.b16 %v322
    %v391 = vunpack.c.l.b16 %v323
    %v392 = vunpack.c.l.b16 %v324
    %v393 = vunpack.c.l.b16 %v325
    %v394 = vunpack.c.l.b16 %v326
    %v395 = vunpack.c.l.b16 %v327
    %v396 = vunpack.c.l.b16 %v328
    %v397 = vunpack.c.l.b16 %v329
    %v398 = vunpack.c.l.b16 %v330
    %v399 = vunpack.c.l.b16 %v331
    %v400 = vunpack.c.l.b16 %v332
    %v401 = vunpack.c.l.b16 %v333
    %v402 = vunpack.c.l.b16 %v334
    %v403 = vunpack.c.l.b16 %v335
    %v404 = vunpack.c.l.b16 %v336
    %v405 = vunpack.c.l.b16 %v337
    %v406 = vunpack.c.l.b16 %v338
    %v407 = vunpack.c.l.b16 %v339
    %v408 = vunpack.c.l.b16 %v340
    %v409 = vunpack.c.l.b16 %v341
    %v410 = vunpack.c.l.b16 %v342
    %v411 = vunpack.c.l.b16 %v343
    %v412 = vunpack.c.l.b16 %v344
    %v413 = vunpack.c.l.b16 %v345
    %v414 = vpack.c.b16 %v383, %v382
    %v415 = vpack.c.b16 %v385, %v384
    %v416 = vpack.c.b16 %v387, %v386
    %v417 = vpack.c.b16 %v389, %v388
    %v418 = vpack.c.b16 %v391, %v390
    %v419 = vpack.c.b16 %v393, %v392
    %v420 = vpack.c.b16 %v395, %v394
    %v421 = vpack.c.b16 %v397, %v396
    %v422 = vpack.c.b16 %v399, %v398
    %v423 = vpack.c.b16 %v401, %v400
    %v424 = vpack.c.b16 %v403, %v402
    %v425 = vpack.c.b16 %v405, %v404
    %v426 = vpack.c.b16 %v407, %v406
    %v427 = vpack.c.b16 %v409, %v408
    %v428 = vpack.c.b16 %v411, %v410
    %v429 = vpack.c.b16 %v413, %v412
    %446 = vmatpush.bf16.msra.mxu0 %v421
    %447 = vmatpush.bf16.msra.mxu0 %v420
    %448 = vmatpush.bf16.msra.mxu0 %v419
    %449 = vmatpush.bf16.msra.mxu0 %v418
    %450 = vmatpush.bf16.msra.mxu0 %v417
    %451 = vmatpush.bf16.msra.mxu0 %v416
    %452 = vmatpush.bf16.msra.mxu0 %v415
    %453 = vmatpush.bf16.msra.mxu0 %v414
    %454 = vmatmul.bf16.gmra.mxu0 %v310
    %v455 = vpop.f32.mrf.mxu0
    %v456 = vadd.f32 %v348, %v455
    %v457 = vpop.f32.mrf.mxu0
    %v458 = vadd.f32 %v348, %v457
    %459 = vmatmul.bf16.gmra.mxu0 %v312
    %v460 = vpop.f32.mrf.mxu0
    %v461 = vadd.f32 %v348, %v460
    %v462 = vpop.f32.mrf.mxu0
    %v463 = vadd.f32 %v348, %v462
    %464 = vdwg.mxu0
    %465 = vmatpush.bf16.msra.mxu0 %v429
    %466 = vmatpush.bf16.msra.mxu0 %v428
    %467 = vmatpush.bf16.msra.mxu0 %v427
    %468 = vmatpush.bf16.msra.mxu0 %v426
    %469 = vmatpush.bf16.msra.mxu0 %v425
    %470 = vmatpush.bf16.msra.mxu0 %v424
    %471 = vmatpush.bf16.msra.mxu0 %v423
    %472 = vmatpush.bf16.msra.mxu0 %v422
    %473 = vmatmul.bf16.gmra.mxu0 %v311
    %v474 = vpop.f32.mrf.mxu0
    %v475 = vadd.f32 %v456, %v474
    %v476 = vpop.f32.mrf.mxu0
    %v477 = vadd.f32 %v458, %v476
    %478 = vmatmul.bf16.gmra.mxu0 %v313
    %v479 = vpop.f32.mrf.mxu0
    %v480 = vadd.f32 %v461, %v479
    %v481 = vpop.f32.mrf.mxu0
    %v482 = vadd.f32 %v463, %v481
    %483 = vdwg.mxu0
    %v484 = vpack.c.bf16 %v475, %v475
    %v485 = vpack.c.bf16 %v477, %v477
    %v486 = vpack.c.bf16 %v480, %v480
    %v487 = vpack.c.bf16 %v482, %v482
    %488 = vst [vmem:[#allocation10] sm:$0xf] %v484
    %489 = vst [vmem:[#allocation10 + $0x4] sm:$0xf] %v485
    %490 = vst [vmem:[#allocation10 + $0x8] sm:$0xf] %v486
    %491 = vst [vmem:[#allocation10 + $0xc] sm:$0xf] %v487
    // Predicated region
    $region38: #{tpu_custom_call.1} parent=1 // pred_check
      _
    $region39: #{tpu_custom_call.1} parent=1 // pred_check_branch
      %493 = sbr.rel (0) target = $region41
    $region40: #{tpu_custom_call.1} parent=1 // pred_region
      %495 = vsyncadd [#allocation4], 0
      %s496 = sshll.u32 [#allocation10], 4
      %s497 = int_to_ptr.vmem [resolvable:$true] %s496
      %s498 = sshll.u32 %s5, 4
      %s499 = int_to_ptr.hbm [resolvable:$true] %s498
      %504 = dma.vmem_to_hbm [thread:$0]  %s497, 256, %s499, [#allocation4], 64, 64, 4
    $region41: #{tpu_custom_call.1} parent=1 // pred_fallthru
      _
    // Predicated region
    $region42: #{tpu_custom_call.1} parent=1 // pred_check
      _
    $region43: #{tpu_custom_call.1} parent=1 // pred_check_branch
      %506 = sbr.rel (0) target = $region45
    $region44: #{tpu_custom_call.1} parent=1 // pred_region
      %508 = dma.done [#allocation4], 256
    $region45: #{tpu_custom_call.1} parent=1 // pred_fallthru
      _
    %509 = vsyncpa [#allocation3], 1
    %510 = vsyncpa [#allocation6], 1
    %511 = vsyncpa [#allocation9], 1
    %512 = vsyncpa [#allocation4], 1

</llo_original>
